<compile_context>
chip_gen: v7x
topology: tpu7x:2x2x1
jax: 0.10.0
libtpu: 0.0.40
codegen_flags: <defaults>
</compile_context>

<pallas_src>
import math
import functools

import jax
import jax.numpy as jnp
from jax.experimental import pallas as pl
from jax.experimental.pallas import tpu as pltpu


_SQRT_2_OVER_PI = math.sqrt(2.0 / math.pi)
_INV_SQRT_2 = 1.0 / math.sqrt(2.0)

# ~2 MiB per block: 2 buffers x (input + output) ~= 8 MiB of scoped VMEM,
# safe on every TPU generation without raising vmem_limit_bytes.
_TARGET_BLOCK_BYTES = 2 * 1024 * 1024
_LANE_WIDTHS = (8192, 4096, 2048, 1024, 512, 256, 128)


def _gelu_kernel(x_ref, o_ref, *, approximate):
    x = x_ref[...]
    xf = x.astype(jnp.float32)
    if approximate == "tanh":
        # 0.5 * x * (1 + tanh(sqrt(2/pi) * (x + 0.044715 * x^3)))
        inner = _SQRT_2_OVER_PI * (xf + 0.044715 * xf * xf * xf)
        g = 0.5 * xf * (1.0 + jnp.tanh(inner))          # tanh -> EUP slot
    else:
        # exact: 0.5 * x * (1 + erf(x / sqrt(2)))
        g = 0.5 * xf * (1.0 + jax.lax.erf(xf * _INV_SQRT_2))
    o_ref[...] = (g * 100.0).astype(o_ref.dtype)


def _pick_lane_width(n):
    """Largest lane-dense width (multiple of 128) dividing n, prefer rows>=8."""
    for w in _LANE_WIDTHS:
        if n % w == 0 and n // w >= 8:
            return w
    for w in _LANE_WIDTHS:
        if n % w == 0:
            return w
    return None


def _round_up(a, m):
    return (a + m - 1) // m * m


def gelu_model_forward(x, approximate="none"):
    """Equivalent of `nn.GELU(approximate)(x) * 100`, elementwise, any shape."""
    orig_shape = x.shape
    orig_dtype = x.dtype
    itemsize = jnp.dtype(orig_dtype).itemsize

    flat = x.reshape(-1)
    n = flat.shape[0]

    w = _pick_lane_width(n)
    if w is None:
        # Rare fallback (n not a multiple of 128): minimal zero-pad to a
        # lane-dense width; padded tail is sliced off below.
        w = 1024
        n_used = _round_up(n, w)
        flat = jnp.pad(flat, (0, n_used - n))
    else:
        n_used = n

    rows = n_used // w
    x2d = flat.reshape(rows, w)

    # Pick block_rows: ~2 MiB blocks (multiple of 8 sublanes), full rows if
    # the whole array is smaller, and >= 2 grid steps when there is enough
    # data so both TensorCores get work on v7x.
    target_rows = max(8, (_TARGET_BLOCK_BYTES // (w * itemsize)) // 8 * 8)
    if rows <= target_rows:
        if rows >= 16:
            block_rows = _round_up(pl.cdiv(rows, 2), 8)
        else:
            block_rows = rows  # equals full array dim -> always legal
    else:
        block_rows = target_rows
    grid_n = pl.cdiv(rows, block_rows)  # ragged last block -> masked writes

    kernel = functools.partial(_gelu_kernel, approximate=approximate)

    cost = pl.CostEstimate(
        flops=10 * n_used,
        transcendentals=n_used,
        bytes_accessed=2 * n_used * itemsize,
    )

    out2d = pl.pallas_call(
        kernel,
        out_shape=jax.ShapeDtypeStruct((rows, w), orig_dtype),
        grid_spec=pltpu.PrefetchScalarGridSpec(
            num_scalar_prefetch=0,
            grid=(grid_n,),
            in_specs=[pl.BlockSpec((block_rows, w), lambda i: (i, 0))],
            out_specs=pl.BlockSpec((block_rows, w), lambda i: (i, 0)),
        ),
        compiler_params=pltpu.CompilerParams(
            dimension_semantics=("parallel",)),
        cost_estimate=cost,
    )(x2d)

    out = out2d.reshape(-1)
    if n_used != n:
        out = out[:n]
    return out.reshape(orig_shape)


if __name__ == "__main__":
    key = jax.random.PRNGKey(0)
    # NCHW input, small shape consistent with the elementwise module.
    x = jax.random.normal(key, (2, 4, 16, 16), dtype=jnp.float32)

    # Run both `approximate` modes supported by nn.GELU.
    y_exact = jax.block_until_ready(gelu_model_forward(x, approximate="none"))
    y_tanh = jax.block_until_ready(gelu_model_forward(x, approximate="tanh"))

    # Reference check against plain-JAX GELU * 100.
    ref_exact = jax.nn.gelu(x, approximate=False) * 100.0
    ref_tanh = jax.nn.gelu(x, approximate=True) * 100.0
    assert jnp.allclose(y_exact, ref_exact, atol=1e-3, rtol=1e-3)
    assert jnp.allclose(y_tanh, ref_tanh, atol=1e-3, rtol=1e-3)
    assert y_exact.shape == x.shape and y_exact.dtype == x.dtype

    print("KERNEL_OK")
</pallas_src>

<mosaic_0001>
module attributes {stable_mosaic.version = 11 : i64} {
  func.func @_gelu_kernel(%arg0: i32, %arg1: memref<8x256xf32, #tpu.memory_space<vmem>>, %arg2: memref<8x256xf32, #tpu.memory_space<vmem>>) attributes {dimension_semantics = [#tpu.dimension_semantics<parallel>], iteration_bounds = array<i64: 1>, scalar_prefetch = 0 : i64, scratch_operands = 0 : i64, tpu.core_type = #tpu.core_type<tc>, window_params = [{transform_indices = @transform_0, window_bounds = array<i64: 8, 256>}, {transform_indices = @transform_1, window_bounds = array<i64: 8, 256>}]} {
    %c0 = arith.constant 0 : index
    %c0_0 = arith.constant 0 : index
    %0 = vector.load %arg1[%c0, %c0_0] : memref<8x256xf32, #tpu.memory_space<vmem>>, vector<8x256xf32>
    %cst = arith.constant 5.000000e-01 : f32
    %1 = vector.broadcast %cst : f32 to vector<8x256xf32>
    %2 = arith.mulf %1, %0 : vector<8x256xf32>
    %cst_1 = arith.constant 0.707106769 : f32
    %3 = vector.broadcast %cst_1 : f32 to vector<8x256xf32>
    %4 = arith.mulf %0, %3 : vector<8x256xf32>
    %5 = math.erf %4 : vector<8x256xf32>
    %cst_2 = arith.constant 1.000000e+00 : f32
    %6 = vector.broadcast %cst_2 : f32 to vector<8x256xf32>
    %7 = arith.addf %6, %5 : vector<8x256xf32>
    %8 = arith.mulf %2, %7 : vector<8x256xf32>
    %cst_3 = arith.constant 1.000000e+02 : f32
    %9 = vector.broadcast %cst_3 : f32 to vector<8x256xf32>
    %10 = arith.mulf %8, %9 : vector<8x256xf32>
    %c0_4 = arith.constant 0 : index
    %c0_5 = arith.constant 0 : index
    %11 = vector.load %arg2[%c0_4, %c0_5] : memref<8x256xf32, #tpu.memory_space<vmem>>, vector<8x256xf32>
    tpu.vector_store %arg2[%c0_4, %c0_5], %10 {strides = array<i32>} : memref<8x256xf32, #tpu.memory_space<vmem>>, vector<8x256xf32>,
    return
  }
  func.func @transform_0(%arg0: i32) -> (i32, i32) {
    %c0_i32 = arith.constant 0 : i32
    %c0_i32_0 = arith.constant 0 : i32
    return %arg0, %c0_i32 : i32, i32
  }
  func.func @transform_1(%arg0: i32) -> (i32, i32) {
    %c0_i32 = arith.constant 0 : i32
    %c0_i32_0 = arith.constant 0 : i32
    return %arg0, %c0_i32 : i32, i32
  }
}

</mosaic_0001>

<llo_original>
// kernel: tpu_custom_call.1
$region0: #{tpu_custom_call.1}
  #allocation0 [shape = 'u32[]', space=smem, size = 0x4, offset = 0x4, fixed_abs, tag = 'smem constant byte address 0x4 - core index']
  #allocation1 [shape = 'u32[144,128]{1,0:T(1,128)}', space=vmem, size = 0x12000, scoped, tag = 'internal scratch']
  %s0 = inlined_call_operand.hbm [shape: f32[8,256], index: 0, kind: input, shape index: {}]
  %s1 = inlined_call_operand.hbm [shape: f32[8,256], index: 1, kind: output, shape index: {}]
  %s2 = sld [smem:[#allocation0]]
  $region18: #{tpu_custom_call.1} parent=0
    _
  %s4 = ssub.s32 1, %s2
  %s5 = scalar_select 0, %s4, %s2
  $region1: #{tpu_custom_call.1} parent=0
    #allocation2 [shape = 'u8[8192]{0}', space=vmem, size = 0x2000, scoped, tag = 'input window, operand 0, single buffered']
    #allocation3 [shape = 's32[1]{0}', space=sflag, size = 0x4, scoped, tag = 'scoped memory for tpu_custom_call.1']
    #allocation4 [shape = 's32[1]{0}', space=sflag, size = 0x4, scoped, tag = 'scoped memory for tpu_custom_call.1']
    #allocation5 [shape = 'u8[8192]{0}', space=vmem, size = 0x2000, scoped, tag = 'output window, operand 0, single buffered']
    %6 = vsyncpa [#allocation3], 0
    %7 = vsyncpa [#allocation4], 0
    // Predicated region
    $region2: #{tpu_custom_call.1} parent=1 // pred_check
      _
    $region3: #{tpu_custom_call.1} parent=1 // pred_check_branch
      %9 = sbr.rel (0) target = $region5
    $region4: #{tpu_custom_call.1} parent=1 // pred_region
      %s11 = ssub.s32 256, 256
      %12 = vsyncadd [#allocation3], %s11
      %s14 = sshll.u32 [#allocation2], 4
      %s15 = int_to_ptr.vmem [resolvable:$true] %s14
      %17 = dma.hbm_to_vmem [thread:$0]  %s0, 256, %s15, [#allocation3]
    $region5: #{tpu_custom_call.1} parent=1 // pred_fallthru
      _
    // Predicated region
    $region6: #{tpu_custom_call.1} parent=1 // pred_check
      _
    $region7: #{tpu_custom_call.1} parent=1 // pred_check_branch
      %19 = sbr.rel (0) target = $region9
    $region8: #{tpu_custom_call.1} parent=1 // pred_region
      %20 = dma.done [#allocation3], 256
    $region9: #{tpu_custom_call.1} parent=1 // pred_fallthru
      _
    %v21 = vld [vmem:[#allocation2] sm:$0xff]
    %v22 = vld [vmem:[#allocation2 + $0x8] sm:$0xff]
    %v23 = vmul.f32 %v21, 0.5
    %v24 = vmul.f32 %v22, 0.5
    %v25 = vmul.f32 %v21, 0.70710677
    %v26 = vmul.f32 %v22, 0.70710677
    %v27 = verf.f32.pop %v25
    %v28 = verf.f32.pop %v26
    %v29 = vadd.f32 %v27, 1.0
    %v30 = vadd.f32 %v28, 1.0
    %v31 = vmul.f32 %v23, %v29
    %v32 = vmul.f32 %v24, %v30
    %v33 = vmul.f32 %v31, 100.0
    %v34 = vmul.f32 %v32, 100.0
    %35 = vst [vmem:[#allocation5] sm:$0xff] %v33
    %36 = vst [vmem:[#allocation5 + $0x8] sm:$0xff] %v34
    // Predicated region
    $region10: #{tpu_custom_call.1} parent=1 // pred_check
      _
    $region11: #{tpu_custom_call.1} parent=1 // pred_check_branch
      %38 = sbr.rel (0) target = $region13
    $region12: #{tpu_custom_call.1} parent=1 // pred_region
      %s40 = ssub.s32 256, 256
      %41 = vsyncadd [#allocation4], %s40
      %s43 = sshll.u32 [#allocation5], 4
      %s44 = int_to_ptr.vmem [resolvable:$true] %s43
      %46 = dma.vmem_to_hbm [thread:$0]  %s44, 256, %s1, [#allocation4]
    $region13: #{tpu_custom_call.1} parent=1 // pred_fallthru
      _
    // Predicated region
    $region14: #{tpu_custom_call.1} parent=1 // pred_check
      _
    $region15: #{tpu_custom_call.1} parent=1 // pred_check_branch
      %48 = sbr.rel (0) target = $region17
    $region16: #{tpu_custom_call.1} parent=1 // pred_region
      %49 = dma.done [#allocation4], 256
    $region17: #{tpu_custom_call.1} parent=1 // pred_fallthru
      _
    %50 = vsyncpa [#allocation3], 1
    %51 = vsyncpa [#allocation4], 1

</llo_original>
